<compile_context>
chip_gen: v7x
topology: tpu7x:2x2x1
jax: 0.10.0
libtpu: 0.0.40
codegen_flags: <defaults>
</compile_context>

<pallas_src>
import functools
import math

import jax
import jax.numpy as jnp
from jax.experimental import pallas as pl
from jax.experimental.pallas import tpu as pltpu

# ----------------------------- config ---------------------------------------
HIDDEN = 768            # matches nn.Linear(768, 2) in the module
N_LAYERS = 2            # real model: 12 (reduced for a fast synthetic demo)
N_HEADS = 12
HEAD_DIM = HIDDEN // N_HEADS
INTERMEDIATE = 3072
VOCAB = 128             # real vocab: 21128 (reduced)
MAX_POS = 32
LN_EPS = 1e-12
NUM_CLASSES = 2
CLS_PAD = 128           # lane-dense padded classifier width (slice to 2 outside)

_VMEM_LIMIT = 48 * 1024 * 1024   # fits v7x 64 MiB VMEM with headroom

_cp_single = pltpu.CompilerParams(
    dimension_semantics=("arbitrary",),
    vmem_limit_bytes=_VMEM_LIMIT,
)
_cp_parallel = pltpu.CompilerParams(
    dimension_semantics=("parallel",),   # v7x: shard batches over the 2 TCs
    vmem_limit_bytes=_VMEM_LIMIT,
)


# ----------------------------- in-kernel helpers -----------------------------
def _ln(x, g, b, eps):
    mean = jnp.mean(x, axis=-1, keepdims=True)
    var = jnp.mean(jnp.square(x - mean), axis=-1, keepdims=True)
    return (x - mean) * jax.lax.rsqrt(var + eps) * g + b


def _bf16(x):
    return x.astype(jnp.bfloat16)


# ----------------------------- kernels ---------------------------------------
def emb_layernorm_kernel(x_ref, g_ref, b_ref, o_ref):
    o_ref[...] = _ln(x_ref[...], g_ref[...], b_ref[...], LN_EPS)


def qkv_attn_kernel(x_ref, wqkv_ref, bqkv_ref, bias_ref, o_ref, *, scale):
    """One batch per grid step: fused QKV matmul + 12-head attention.

    x:[S,H] f32, wqkv:[H,3H] bf16, bqkv:[1,3H] f32, bias:[1,1,S], out:[S,H] f32.
    Heads are static 64-wide column slices -> no split/merge-head transposes.
    """
    x = _bf16(x_ref[...])
    qkv = jnp.dot(x, wqkv_ref[...], preferred_element_type=jnp.float32)
    qkv = qkv + bqkv_ref[...]                              # [S, 3H] f32
    bias = bias_ref[0]                                     # [1, S] additive mask
    ctx_heads = []
    for h in range(N_HEADS):
        q_h = qkv[:, h * HEAD_DIM:(h + 1) * HEAD_DIM]
        k_h = qkv[:, HIDDEN + h * HEAD_DIM: HIDDEN + (h + 1) * HEAD_DIM]
        v_h = qkv[:, 2 * HIDDEN + h * HEAD_DIM: 2 * HIDDEN + (h + 1) * HEAD_DIM]
        s = jnp.dot(_bf16(q_h), _bf16(k_h).T,
                    preferred_element_type=jnp.float32) * scale + bias
        m = jnp.max(s, axis=-1, keepdims=True)
        p = jnp.exp(s - m)
        p = p * pl.reciprocal(jnp.sum(p, axis=-1, keepdims=True), approx=True)
        ctx_heads.append(jnp.dot(_bf16(p), _bf16(v_h),
                                 preferred_element_type=jnp.float32))
    o_ref[...] = jnp.concatenate(ctx_heads, axis=-1)       # lane-dense [S, H]


def proj_add_ln_kernel(ctx_ref, res_ref, w_ref, b_ref, g_ref, beta_ref, o_ref):
    """Attention output projection + residual add + LayerNorm, fused."""
    y = jnp.dot(_bf16(ctx_ref[...]), w_ref[...],
                preferred_element_type=jnp.float32) + b_ref[...]
    o_ref[...] = _ln(res_ref[...] + y, g_ref[...], beta_ref[...], LN_EPS)


def ffn_add_ln_kernel(x_ref, w1_ref, b1_ref, w2_ref, b2_ref, g_ref, beta_ref,
                      o_ref):
    """Full FFN (w1 -> GELU -> w2) + residual add + LayerNorm, fused.

    Both bf16 weights (~9 MiB) stay resident in VMEM; the [M,3072] intermediate
    never touches HBM.
    # TODO(synk): for large B*S this kernel should be M/K/N-tiled (v7x 64 MiB
    # VMEM); at B*S=16 the monolithic block is well within limits.
    """
    x = x_ref[...]
    h = jnp.dot(_bf16(x), w1_ref[...],
                preferred_element_type=jnp.float32) + b1_ref[...]
    # TODO(synk): HF BERT uses erf-GELU; tanh approximation used for robust
    # Mosaic lowering (EUP tanh).
    h = jax.nn.gelu(h, approximate=True)
    y = jnp.dot(_bf16(h), w2_ref[...],
                preferred_element_type=jnp.float32) + b2_ref[...]
    o_ref[...] = _ln(x + y, g_ref[...], beta_ref[...], LN_EPS)


def pooler_cls_kernel(x_ref, pw_ref, pb_ref, cw_ref, cb_ref, o_ref):
    """tanh pooler + (eval-mode dropout = identity) + Linear(768,2 pad 128) + ReLU."""
    pooled = jnp.tanh(jnp.dot(_bf16(x_ref[...]), pw_ref[...],
                              preferred_element_type=jnp.float32) + pb_ref[...])
    # TODO(synk): training-mode dropout (pltpu.prng_*) omitted; eval semantics.
    logits = jnp.dot(_bf16(pooled), cw_ref[...],
                     preferred_element_type=jnp.float32) + cb_ref[...]
    o_ref[...] = jnp.maximum(logits, 0.0)


# ----------------------------- wrappers --------------------------------------
def _full_block(arr):
    nd = arr.ndim
    return pl.BlockSpec(arr.shape, lambda i, _nd=nd: (0,) * _nd)


def _single_call(kernel, out_shape, *inputs):
    """grid=(1,) pallas_call with whole-array blocks (M is tiny here)."""
    nd_out = len(out_shape)
    return pl.pallas_call(
        kernel,
        out_shape=jax.ShapeDtypeStruct(out_shape, jnp.float32),
        grid=(1,),
        in_specs=[_full_block(x) for x in inputs],
        out_specs=pl.BlockSpec(out_shape, lambda i, _nd=nd_out: (0,) * _nd),
        compiler_params=_cp_single,
    )(*inputs)


def qkv_attention(x2d, wqkv, bqkv, mask_bias, B, S):
    return pl.pallas_call(
        functools.partial(qkv_attn_kernel, scale=1.0 / math.sqrt(HEAD_DIM)),
        out_shape=jax.ShapeDtypeStruct((B * S, HIDDEN), jnp.float32),
        grid=(B,),
        in_specs=[
            pl.BlockSpec((S, HIDDEN), lambda b: (b, 0)),
            pl.BlockSpec((HIDDEN, 3 * HIDDEN), lambda b: (0, 0)),   # resident
            pl.BlockSpec((1, 3 * HIDDEN), lambda b: (0, 0)),
            pl.BlockSpec((1, 1, S), lambda b: (b, 0, 0)),
        ],
        out_specs=pl.BlockSpec((S, HIDDEN), lambda b: (b, 0)),
        compiler_params=_cp_parallel,
    )(x2d, wqkv, bqkv, mask_bias)


# ----------------------------- model glue ------------------------------------
def encoder_layer(x2d, lp, mask_bias, B, S):
    ctx = qkv_attention(x2d, lp["wqkv"], lp["bqkv"], mask_bias, B, S)
    x2d = _single_call(proj_add_ln_kernel, (B * S, HIDDEN),
                       ctx, x2d, lp["wo"], lp["bo"], lp["ln1_g"], lp["ln1_b"])
    x2d = _single_call(ffn_add_ln_kernel, (B * S, HIDDEN),
                       x2d, lp["w1"], lp["b1"], lp["w2"], lp["b2"],
                       lp["ln2_g"], lp["ln2_b"])
    return x2d


def bert_classifier_forward(params, input_id, mask):
    B, S = input_id.shape
    # embeddings (gather is plain-JAX glue; tiny)
    we = jnp.take(params["word_emb"], input_id, axis=0)              # [B,S,H]
    pe = params["pos_emb"][:S][None, :, :]                           # [1,S,H]
    te = params["type_emb"][0][None, None, :]                        # [1,1,H]
    emb = (we + pe + te).reshape(B * S, HIDDEN)
    x2d = _single_call(emb_layernorm_kernel, (B * S, HIDDEN),
                       emb, params["emb_ln_g"], params["emb_ln_b"])

    # additive attention mask, HF-BERT convention: (1 - mask) * -10000
    mask_bias = ((1.0 - mask.astype(jnp.float32)) * -10000.0).reshape(B, 1, S)

    for lp in params["layers"]:
        x2d = encoder_layer(x2d, lp, mask_bias, B, S)

    # pooler(tanh) -> dropout(eval identity) -> Linear(768,2) -> ReLU
    cls_tok = x2d.reshape(B, S, HIDDEN)[:, 0, :]                     # [B, H]
    logits_padded = _single_call(pooler_cls_kernel, (B, CLS_PAD),
                                 cls_tok, params["pool_w"], params["pool_b"],
                                 params["cls_w_pad"], params["cls_b_pad"])
    return logits_padded[:, :NUM_CLASSES]


# ----------------------------- params ----------------------------------------
def init_params(key):
    def nrm(k, shape, dtype=jnp.bfloat16):
        return (jax.random.normal(k, shape, jnp.float32) * 0.02).astype(dtype)

    keys = iter(jax.random.split(key, 16 + N_LAYERS * 8))
    cls_w = nrm(next(keys), (HIDDEN, NUM_CLASSES))
    cls_w_pad = jnp.zeros((HIDDEN, CLS_PAD), jnp.bfloat16).at[:, :NUM_CLASSES].set(cls_w)

    p = {
        "word_emb": nrm(next(keys), (VOCAB, HIDDEN), jnp.float32),
        "pos_emb":  nrm(next(keys), (MAX_POS, HIDDEN), jnp.float32),
        "type_emb": nrm(next(keys), (2, HIDDEN), jnp.float32),
        "emb_ln_g": jnp.ones((1, HIDDEN), jnp.float32),
        "emb_ln_b": jnp.zeros((1, HIDDEN), jnp.float32),
        "pool_w":   nrm(next(keys), (HIDDEN, HIDDEN)),               # bf16
        "pool_b":   jnp.zeros((1, HIDDEN), jnp.float32),
        "cls_w_pad": cls_w_pad,                                      # bf16, padded
        "cls_b_pad": jnp.zeros((1, CLS_PAD), jnp.float32),
        "layers":   [],
    }
    for _ in range(N_LAYERS):
        lp = {
            # fused QKV weight [H, 3H] (q | k | v column blocks)
            "wqkv": nrm(next(keys), (HIDDEN, 3 * HIDDEN)),           # bf16
            "bqkv": jnp.zeros((1, 3 * HIDDEN), jnp.float32),
            "wo":   nrm(next(keys), (HIDDEN, HIDDEN)),               # bf16
            "bo":   jnp.zeros((1, HIDDEN), jnp.float32),
            "w1":   nrm(next(keys), (HIDDEN, INTERMEDIATE)),         # bf16
            "b1":   jnp.zeros((1, INTERMEDIATE), jnp.float32),
            "w2":   nrm(next(keys), (INTERMEDIATE, HIDDEN)),         # bf16
            "b2":   jnp.zeros((1, HIDDEN), jnp.float32),
            "ln1_g": jnp.ones((1, HIDDEN), jnp.float32),
            "ln1_b": jnp.zeros((1, HIDDEN), jnp.float32),
            "ln2_g": jnp.ones((1, HIDDEN), jnp.float32),
            "ln2_b": jnp.zeros((1, HIDDEN), jnp.float32),
        }
        p["layers"].append(lp)
    return p


# ----------------------------- main -------------------------------------------
if __name__ == "__main__":
    B, S = 2, 8
    root = jax.random.PRNGKey(0)
    k_params, k_ids = jax.random.split(root)

    params = init_params(k_params)
    input_id = jax.random.randint(k_ids, (B, S), 0, VOCAB, dtype=jnp.int32)
    mask = jnp.array([[1, 1, 1, 1, 1, 1, 1, 1],
                      [1, 1, 1, 1, 1, 1, 0, 0]], dtype=jnp.float32)

    logits = bert_classifier_forward(params, input_id, mask)
    logits = jax.block_until_ready(logits)

    assert logits.shape == (B, NUM_CLASSES)
    assert bool(jnp.all(logits >= 0.0))        # ReLU output is non-negative
    assert bool(jnp.all(jnp.isfinite(logits)))
    print("KERNEL_OK")
</pallas_src>

<mosaic_0001>
module attributes {stable_mosaic.version = 11 : i64} {
  func.func @emb_layernorm_kernel(%arg0: i32, %arg1: memref<16x768xf32, #tpu.memory_space<vmem>>, %arg2: memref<1x768xf32, #tpu.memory_space<vmem>>, %arg3: memref<1x768xf32, #tpu.memory_space<vmem>>, %arg4: memref<16x768xf32, #tpu.memory_space<vmem>>) attributes {dimension_semantics = [#tpu.dimension_semantics<arbitrary>], iteration_bounds = array<i64: 1>, scalar_prefetch = 0 : i64, scratch_operands = 0 : i64, tpu.core_type = #tpu.core_type<tc>, window_params = [{pipeline_mode = #tpu.pipeline_mode<synchronous>, transform_indices = @transform_0, window_bounds = array<i64: 16, 768>}, {pipeline_mode = #tpu.pipeline_mode<synchronous>, transform_indices = @transform_1, window_bounds = array<i64: 1, 768>}, {pipeline_mode = #tpu.pipeline_mode<synchronous>, transform_indices = @transform_2, window_bounds = array<i64: 1, 768>}, {pipeline_mode = #tpu.pipeline_mode<synchronous>, transform_indices = @transform_3, window_bounds = array<i64: 16, 768>}]} {
    %c0 = arith.constant 0 : index
    %c0_0 = arith.constant 0 : index
    %0 = vector.load %arg1[%c0, %c0_0] : memref<16x768xf32, #tpu.memory_space<vmem>>, vector<16x768xf32>
    %c0_1 = arith.constant 0 : index
    %c0_2 = arith.constant 0 : index
    %1 = vector.load %arg2[%c0_1, %c0_2] : memref<1x768xf32, #tpu.memory_space<vmem>>, vector<1x768xf32>
    %c0_3 = arith.constant 0 : index
    %c0_4 = arith.constant 0 : index
    %2 = vector.load %arg3[%c0_3, %c0_4] : memref<1x768xf32, #tpu.memory_space<vmem>>, vector<1x768xf32>
    %cst = arith.constant dense<0.000000e+00> : vector<16xf32>
    %3 = vector.multi_reduction <add>, %0, %cst [1] : vector<16x768xf32> to vector<16xf32>
    %4 = vector.shape_cast %3 : vector<16xf32> to vector<16x1xf32>
    %cst_5 = arith.constant 7.680000e+02 : f32
    %5 = vector.broadcast %cst_5 : f32 to vector<16x1xf32>
    %6 = arith.divf %4, %5 : vector<16x1xf32>
    %7 = vector.broadcast %6 : vector<16x1xf32> to vector<16x768xf32>
    %8 = arith.subf %0, %7 : vector<16x768xf32>
    %9 = arith.mulf %8, %8 : vector<16x768xf32>
    %cst_6 = arith.constant dense<0.000000e+00> : vector<16xf32>
    %10 = vector.multi_reduction <add>, %9, %cst_6 [1] : vector<16x768xf32> to vector<16xf32>
    %11 = vector.shape_cast %10 : vector<16xf32> to vector<16x1xf32>
    %cst_7 = arith.constant 7.680000e+02 : f32
    %12 = vector.broadcast %cst_7 : f32 to vector<16x1xf32>
    %13 = arith.divf %11, %12 : vector<16x1xf32>
    %14 = vector.broadcast %6 : vector<16x1xf32> to vector<16x768xf32>
    %15 = arith.subf %0, %14 : vector<16x768xf32>
    %cst_8 = arith.constant 9.99999996E-13 : f32
    %16 = vector.broadcast %cst_8 : f32 to vector<16x1xf32>
    %17 = arith.addf %13, %16 : vector<16x1xf32>
    %18 = math.rsqrt %17 : vector<16x1xf32>
    %19 = vector.broadcast %18 : vector<16x1xf32> to vector<16x768xf32>
    %20 = arith.mulf %15, %19 : vector<16x768xf32>
    %21 = vector.broadcast %1 : vector<1x768xf32> to vector<16x768xf32>
    %22 = arith.mulf %20, %21 : vector<16x768xf32>
    %23 = vector.broadcast %2 : vector<1x768xf32> to vector<16x768xf32>
    %24 = arith.addf %22, %23 : vector<16x768xf32>
    %c0_9 = arith.constant 0 : index
    %c0_10 = arith.constant 0 : index
    %25 = vector.load %arg4[%c0_9, %c0_10] : memref<16x768xf32, #tpu.memory_space<vmem>>, vector<16x768xf32>
    tpu.vector_store %arg4[%c0_9, %c0_10], %24 {strides = array<i32>} : memref<16x768xf32, #tpu.memory_space<vmem>>, vector<16x768xf32>,
    return
  }
  func.func @transform_0(%arg0: i32) -> (i32, i32) {
    %c0_i32 = arith.constant 0 : i32
    %c0_i32_0 = arith.constant 0 : i32
    %c0_i32_1 = arith.constant 0 : i32
    return %c0_i32, %c0_i32_0 : i32, i32
  }
  func.func @transform_1(%arg0: i32) -> (i32, i32) {
    %c0_i32 = arith.constant 0 : i32
    %c0_i32_0 = arith.constant 0 : i32
    %c0_i32_1 = arith.constant 0 : i32
    return %c0_i32, %c0_i32_0 : i32, i32
  }
  func.func @transform_2(%arg0: i32) -> (i32, i32) {
    %c0_i32 = arith.constant 0 : i32
    %c0_i32_0 = arith.constant 0 : i32
    %c0_i32_1 = arith.constant 0 : i32
    return %c0_i32, %c0_i32_0 : i32, i32
  }
  func.func @transform_3(%arg0: i32) -> (i32, i32) {
    %c0_i32 = arith.constant 0 : i32
    %c0_i32_0 = arith.constant 0 : i32
    %c0_i32_1 = arith.constant 0 : i32
    return %c0_i32, %c0_i32_0 : i32, i32
  }
}

</mosaic_0001>

<llo_original>
// kernel: tpu_custom_call.1
$region0: #{tpu_custom_call.1}
  #allocation0 [shape = 'u32[]', space=smem, size = 0x4, offset = 0x4, fixed_abs, tag = 'smem constant byte address 0x4 - core index']
  #allocation1 [shape = 'u32[144,128]{1,0:T(1,128)}', space=vmem, size = 0x12000, scoped, tag = 'internal scratch']
  %s0 = inlined_call_operand.hbm [shape: f32[16,768], index: 0, kind: input, shape index: {}]
  %s1 = inlined_call_operand.hbm [shape: f32[1,768], index: 1, kind: input, shape index: {}]
  %s2 = inlined_call_operand.vmem [shape: f32[1,768], index: 2, kind: input, shape index: {}]
  %s3 = inlined_call_operand.hbm [shape: f32[16,768], index: 3, kind: output, shape index: {}]
  %s4 = sld [smem:[#allocation0]]
  $region30: #{tpu_custom_call.1} parent=0
    _
  %s6 = ssub.s32 1, %s4
  %s7 = scalar_select 0, %s6, %s4
  $region1: #{tpu_custom_call.1} parent=0
    #allocation2 [shape = 'u8[49152]{0}', space=vmem, size = 0xc000, scoped, tag = 'input window, operand 0, single buffered']
    #allocation3 [shape = 's32[1]{0}', space=sflag, size = 0x4, scoped, tag = 'scoped memory for tpu_custom_call.1']
    #allocation4 [shape = 's32[1]{0}', space=sflag, size = 0x4, scoped, tag = 'scoped memory for tpu_custom_call.1']
    #allocation5 [shape = 'u8[3072]{0}', space=vmem, size = 0xc00, scoped, tag = 'input window, operand 1, single buffered']
    #allocation6 [shape = 's32[1]{0}', space=sflag, size = 0x4, scoped, tag = 'scoped memory for tpu_custom_call.1']
    #allocation7 [shape = 'u8[49152]{0}', space=vmem, size = 0xc000, scoped, tag = 'output window, operand 0, single buffered']
    %8 = vsyncpa [#allocation3], 0
    %9 = vsyncpa [#allocation6], 0
    %10 = vsyncpa [#allocation4], 0
    // Predicated region
    $region2: #{tpu_custom_call.1} parent=1 // pred_check
      _
    $region3: #{tpu_custom_call.1} parent=1 // pred_check_branch
      %12 = sbr.rel (0) target = $region5
    $region4: #{tpu_custom_call.1} parent=1 // pred_region
      %s14 = ssub.s32 1536, 1536
      %15 = vsyncadd [#allocation3], %s14
      %s16 = sshll.u32 [#allocation2], 4
      %s17 = int_to_ptr.vmem [resolvable:$true] %s16
      %22 = dma.hbm_to_vmem [thread:$0]  %s0, 1536, %s17, [#allocation3], 768, 768, 48
    $region5: #{tpu_custom_call.1} parent=1 // pred_fallthru
      _
    // Predicated region
    $region6: #{tpu_custom_call.1} parent=1 // pred_check
      _
    $region7: #{tpu_custom_call.1} parent=1 // pred_check_branch
      %24 = sbr.rel (0) target = $region9
    $region8: #{tpu_custom_call.1} parent=1 // pred_region
      %s26 = ssub.s32 96, 96
      %27 = vsyncadd [#allocation6], %s26
      %s29 = sshll.u32 [#allocation5], 4
      %s30 = int_to_ptr.vmem [resolvable:$true] %s29
      %32 = dma.hbm_to_vmem [thread:$0]  %s1, 96, %s30, [#allocation6]
    $region9: #{tpu_custom_call.1} parent=1 // pred_fallthru
      _
    // Predicated region
    $region10: #{tpu_custom_call.1} parent=1 // pred_check
      _
    $region11: #{tpu_custom_call.1} parent=1 // pred_check_branch
      %34 = sbr.rel (0) target = $region13
    $region12: #{tpu_custom_call.1} parent=1 // pred_region
      _
    $region13: #{tpu_custom_call.1} parent=1 // pred_fallthru
      _
    // Predicated region
    $region14: #{tpu_custom_call.1} parent=1 // pred_check
      _
    $region15: #{tpu_custom_call.1} parent=1 // pred_check_branch
      %36 = sbr.rel (0) target = $region17
    $region16: #{tpu_custom_call.1} parent=1 // pred_region
      %37 = dma.done [#allocation3], 1536
    $region17: #{tpu_custom_call.1} parent=1 // pred_fallthru
      _
    // Predicated region
    $region18: #{tpu_custom_call.1} parent=1 // pred_check
      _
    $region19: #{tpu_custom_call.1} parent=1 // pred_check_branch
      %39 = sbr.rel (0) target = $region21
    $region20: #{tpu_custom_call.1} parent=1 // pred_region
      %40 = dma.done [#allocation6], 96
    $region21: #{tpu_custom_call.1} parent=1 // pred_fallthru
      _
    %v41 = vld [vmem:[#allocation2] sm:$0xff]
    %v42 = vld [vmem:[#allocation2 + $0x8] sm:$0xff]
    %v43 = vld [vmem:[#allocation2 + $0x10] sm:$0xff]
    %v44 = vld [vmem:[#allocation2 + $0x18] sm:$0xff]
    %v45 = vld [vmem:[#allocation2 + $0x20] sm:$0xff]
    %v46 = vld [vmem:[#allocation2 + $0x28] sm:$0xff]
    %v47 = vld [vmem:[#allocation2 + $0x30] sm:$0xff]
    %v48 = vld [vmem:[#allocation2 + $0x38] sm:$0xff]
    %v49 = vld [vmem:[#allocation2 + $0x40] sm:$0xff]
    %v50 = vld [vmem:[#allocation2 + $0x48] sm:$0xff]
    %v51 = vld [vmem:[#allocation2 + $0x50] sm:$0xff]
    %v52 = vld [vmem:[#allocation2 + $0x58] sm:$0xff]
    %v53 = vld [vmem:[#allocation5] sm:$0x3f]
    %v54 = vld [vmem:[%s2] sm:$0x3f]
    %v55 = vadd.f32 %v41, %v42
    %v56 = vadd.f32 %v55, %v43
    %v57 = vadd.f32 %v56, %v44
    %v58 = vadd.f32 %v57, %v45
    %v59 = vadd.f32 %v58, %v46
    %60 = vadd.xlane.f32.xlu0 %v59
    %v61 = vpop.xlane.xlu0 %60
    %v62 = vadd.f32 %v47, %v48
    %v63 = vadd.f32 %v62, %v49
    %v64 = vadd.f32 %v63, %v50
    %v65 = vadd.f32 %v64, %v51
    %v66 = vadd.f32 %v65, %v52
    %67 = vadd.xlane.f32.xlu0 %v66
    %v68 = vpop.xlane.xlu0 %67
    %v69 = vrcp.pop 768.0
    %v70 = vmul.f32 %v61, %v69
    %v71 = vmul.f32 %v68, %v69
    %v72 = vsub.f32 %v41, %v70
    %v73 = vsub.f32 %v42, %v70
    %v74 = vsub.f32 %v43, %v70
    %v75 = vsub.f32 %v44, %v70
    %v76 = vsub.f32 %v45, %v70
    %v77 = vsub.f32 %v46, %v70
    %v78 = vsub.f32 %v47, %v71
    %v79 = vsub.f32 %v48, %v71
    %v80 = vsub.f32 %v49, %v71
    %v81 = vsub.f32 %v50, %v71
    %v82 = vsub.f32 %v51, %v71
    %v83 = vsub.f32 %v52, %v71
    %v84 = vmul.f32 %v72, %v72
    %v85 = vmul.f32 %v73, %v73
    %v86 = vmul.f32 %v74, %v74
    %v87 = vmul.f32 %v75, %v75
    %v88 = vmul.f32 %v76, %v76
    %v89 = vmul.f32 %v77, %v77
    %v90 = vmul.f32 %v78, %v78
    %v91 = vmul.f32 %v79, %v79
    %v92 = vmul.f32 %v80, %v80
    %v93 = vmul.f32 %v81, %v81
    %v94 = vmul.f32 %v82, %v82
    %v95 = vmul.f32 %v83, %v83
    %v96 = vadd.f32 %v84, %v85
    %v97 = vadd.f32 %v96, %v86
    %v98 = vadd.f32 %v97, %v87
    %v99 = vadd.f32 %v98, %v88
    %v100 = vadd.f32 %v99, %v89
    %101 = vadd.xlane.f32.xlu0 %v100
    %v102 = vpop.xlane.xlu0 %101
    %v103 = vadd.f32 %v90, %v91
    %v104 = vadd.f32 %v103, %v92
    %v105 = vadd.f32 %v104, %v93
    %v106 = vadd.f32 %v105, %v94
    %v107 = vadd.f32 %v106, %v95
    %108 = vadd.xlane.f32.xlu0 %v107
    %v109 = vpop.xlane.xlu0 %108
    %v110 = vmul.f32 %v102, %v69
    %v111 = vmul.f32 %v109, %v69
    %v112 = vadd.f32 %v110, 1e-12
    %v113 = vadd.f32 %v111, 1e-12
    %v114 = vrsqrt.pop %v112
    %v115 = vrsqrt.pop %v113
    %v116 = vmul.f32 %v72, %v114
    %v117 = vmul.f32 %v73, %v114
    %v118 = vmul.f32 %v74, %v114
    %v119 = vmul.f32 %v75, %v114
    %v120 = vmul.f32 %v76, %v114
    %v121 = vmul.f32 %v77, %v114
    %v122 = vmul.f32 %v78, %v115
    %v123 = vmul.f32 %v79, %v115
    %v124 = vmul.f32 %v80, %v115
    %v125 = vmul.f32 %v81, %v115
    %v126 = vmul.f32 %v82, %v115
    %v127 = vmul.f32 %v83, %v115
    %v129 = vlaneseq
    %v130 = vshrl.u32 %v129, 7
    %v131 = vsub.s32 0, %v130
    %v132 = vrot.slane %v53, %v131
    %v133 = vlaneseq
    %v134 = vshrl.u32 %v133, 7
    %v135 = vsub.s32 1, %v134
    %v136 = vrot.slane %v53, %v135
    %v137 = vlaneseq
    %v138 = vshrl.u32 %v137, 7
    %v139 = vsub.s32 2, %v138
    %v140 = vrot.slane %v53, %v139
    %v141 = vlaneseq
    %v142 = vshrl.u32 %v141, 7
    %v143 = vsub.s32 3, %v142
    %v144 = vrot.slane %v53, %v143
    %v145 = vlaneseq
    %v146 = vshrl.u32 %v145, 7
    %v147 = vsub.s32 4, %v146
    %v148 = vrot.slane %v53, %v147
    %v149 = vlaneseq
    %v150 = vshrl.u32 %v149, 7
    %v151 = vsub.s32 5, %v150
    %v152 = vrot.slane %v53, %v151
    %v159 = vmul.f32 %v116, %v132
    %v160 = vmul.f32 %v117, %v136
    %v161 = vmul.f32 %v118, %v140
    %v162 = vmul.f32 %v119, %v144
    %v163 = vmul.f32 %v120, %v148
    %v164 = vmul.f32 %v121, %v152
    %v165 = vmul.f32 %v122, %v132
    %v166 = vmul.f32 %v123, %v136
    %v167 = vmul.f32 %v124, %v140
    %v168 = vmul.f32 %v125, %v144
    %v169 = vmul.f32 %v126, %v148
    %v170 = vmul.f32 %v127, %v152
    %v172 = vlaneseq
    %v173 = vshrl.u32 %v172, 7
    %v174 = vsub.s32 0, %v173
    %v175 = vrot.slane %v54, %v174
    %v176 = vlaneseq
    %v177 = vshrl.u32 %v176, 7
    %v178 = vsub.s32 1, %v177
    %v179 = vrot.slane %v54, %v178
    %v180 = vlaneseq
    %v181 = vshrl.u32 %v180, 7
    %v182 = vsub.s32 2, %v181
    %v183 = vrot.slane %v54, %v182
    %v184 = vlaneseq
    %v185 = vshrl.u32 %v184, 7
    %v186 = vsub.s32 3, %v185
    %v187 = vrot.slane %v54, %v186
    %v188 = vlaneseq
    %v189 = vshrl.u32 %v188, 7
    %v190 = vsub.s32 4, %v189
    %v191 = vrot.slane %v54, %v190
    %v192 = vlaneseq
    %v193 = vshrl.u32 %v192, 7
    %v194 = vsub.s32 5, %v193
    %v195 = vrot.slane %v54, %v194
    %v202 = vadd.f32 %v159, %v175
    %v203 = vadd.f32 %v160, %v179
    %v204 = vadd.f32 %v161, %v183
    %v205 = vadd.f32 %v162, %v187
    %v206 = vadd.f32 %v163, %v191
    %v207 = vadd.f32 %v164, %v195
    %v208 = vadd.f32 %v165, %v175
    %v209 = vadd.f32 %v166, %v179
    %v210 = vadd.f32 %v167, %v183
    %v211 = vadd.f32 %v168, %v187
    %v212 = vadd.f32 %v169, %v191
    %v213 = vadd.f32 %v170, %v195
    %214 = vst [vmem:[#allocation7] sm:$0xff] %v202
    %215 = vst [vmem:[#allocation7 + $0x8] sm:$0xff] %v203
    %216 = vst [vmem:[#allocation7 + $0x10] sm:$0xff] %v204
    %217 = vst [vmem:[#allocation7 + $0x18] sm:$0xff] %v205
    %218 = vst [vmem:[#allocation7 + $0x20] sm:$0xff] %v206
    %219 = vst [vmem:[#allocation7 + $0x28] sm:$0xff] %v207
    %220 = vst [vmem:[#allocation7 + $0x30] sm:$0xff] %v208
    %221 = vst [vmem:[#allocation7 + $0x38] sm:$0xff] %v209
    %222 = vst [vmem:[#allocation7 + $0x40] sm:$0xff] %v210
    %223 = vst [vmem:[#allocation7 + $0x48] sm:$0xff] %v211
    %224 = vst [vmem:[#allocation7 + $0x50] sm:$0xff] %v212
    %225 = vst [vmem:[#allocation7 + $0x58] sm:$0xff] %v213
    // Predicated region
    $region22: #{tpu_custom_call.1} parent=1 // pred_check
      _
    $region23: #{tpu_custom_call.1} parent=1 // pred_check_branch
      %227 = sbr.rel (0) target = $region25
    $region24: #{tpu_custom_call.1} parent=1 // pred_region
      %s229 = ssub.s32 1536, 1536
      %230 = vsyncadd [#allocation4], %s229
      %s231 = sshll.u32 [#allocation7], 4
      %s232 = int_to_ptr.vmem [resolvable:$true] %s231
      %237 = dma.vmem_to_hbm [thread:$0]  %s232, 1536, %s3, [#allocation4], 768, 768, 48
    $region25: #{tpu_custom_call.1} parent=1 // pred_fallthru
      _
    // Predicated region
    $region26: #{tpu_custom_call.1} parent=1 // pred_check
      _
    $region27: #{tpu_custom_call.1} parent=1 // pred_check_branch
      %239 = sbr.rel (0) target = $region29
    $region28: #{tpu_custom_call.1} parent=1 // pred_region
      %240 = dma.done [#allocation4], 1536
    $region29: #{tpu_custom_call.1} parent=1 // pred_fallthru
      _
    %241 = vsyncpa [#allocation3], 1
    %242 = vsyncpa [#allocation6], 1
    %243 = vsyncpa [#allocation4], 1

</llo_original>
